<compile_context>
chip_gen: v7x
topology: tpu7x:2x2x1
jax: 0.10.0
libtpu: 0.0.40
codegen_flags: <defaults>
</compile_context>

<pallas_src>
import random

import numpy as np
import jax
import jax.numpy as jnp
from jax.experimental import pallas as pl
from jax.experimental.pallas import tpu as pltpu


def _mosaic4_coords(center_x, center_y, s):
    """Static placement rectangles, mirrors Mosaic._mosaic4 (all images s x s)."""
    s2 = 2 * s
    coords = []
    for i in range(4):
        h = w = s
        if i == 0:
            x1a, y1a, x2a, y2a = max(center_x - w, 0), max(center_y - h, 0), center_x, center_y
            x1b, y1b, x2b, y2b = w - (x2a - x1a), h - (y2a - y1a), w, h
        elif i == 1:
            x1a, y1a, x2a, y2a = center_x, max(center_y - h, 0), min(center_x + w, s2), center_y
            x1b, y1b, x2b, y2b = 0, h - (y2a - y1a), min(w, x2a - x1a), h
        elif i == 2:
            x1a, y1a, x2a, y2a = max(center_x - w, 0), center_y, center_x, min(s2, center_y + h)
            x1b, y1b, x2b, y2b = w - (x2a - x1a), 0, w, min(y2a - y1a, h)
        else:
            x1a, y1a, x2a, y2a = center_x, center_y, min(center_x + w, s2), min(s2, center_y + h)
            x1b, y1b, x2b, y2b = 0, 0, min(w, x2a - x1a), min(y2a - y1a, h)
        coords.append((x1a, y1a, x2a, y2a, x1b, y1b, x2b, y2b))
    return coords


def _snap_center(value, lo, hi, align):
    """Snap `value` to a multiple of `align` inside [lo, hi]; cascade to smaller
    power-of-two alignments (finally to no alignment) if the range admits none.
    Aligned centers make every paste / border-zero an unmasked, rotate-free vreg
    store; the only trade-off is a slightly coarser augmentation distribution."""
    lo, hi = int(lo), int(hi)
    a = int(align)
    while a > 1:
        lo_m = -(-lo // a) * a
        hi_m = (hi // a) * a
        if lo_m <= hi_m:
            v = int(round(float(value) / a)) * a
            return min(max(v, lo_m), hi_m)
        a //= 2
    return min(max(int(value), lo), hi)


# Cached (S, 2S) bf16 pair-average matrix P, P[i, r] = 0.5 * (r // 2 == i).
# Left-multiplying averages row pairs; contracting against it on the last dim
# (== right-multiplying by P^T) averages column pairs, so ONE resident constant
# drives the whole 2x2-mean resize on the MXU (and only one constant input to
# keep double-buffered, minimizing wasted VMEM).
_P_CACHE = {}


def _pair_avg_matrix(s):
    if s not in _P_CACHE:
        p = jnp.repeat(jnp.eye(s, dtype=jnp.float32), 2, axis=1) * 0.5   # (S, 2S)
        _P_CACHE[s] = p.astype(jnp.bfloat16)                             # 0.5 exact in bf16
    return _P_CACHE[s]


def mosaic_image(images, coords, s):
    """images: (4, C, S, S) f32 -> mosaic'd + 0.5x-resized image (C, S, S) f32."""
    n, c, h, w = images.shape
    assert n == 4 and h == s and w == s
    s2 = 2 * s
    p_mat = _pair_avg_matrix(s)

    # Covered canvas region is exactly [x_min, x_max) x [y_min, y_max).
    x_min = min(co[0] for co in coords)
    x_max = max(co[2] for co in coords)
    y_min = min(co[1] for co in coords)
    y_max = max(co[3] for co in coords)

    # TODO(synk): torchvision v2 Resize(antialias=True) uses a wider filter; this
    # is exact non-antialiased bilinear at scale 0.5 (2x2 mean), in bf16.

    def kernel(imgs_ref, p_ref, out_ref, canvas_ref):
        # imgs_ref:   (4, 1, S, S) f32  -- current channel of all 4 source images
        # p_ref:      (S, 2S) bf16      -- pair-average matrix (same block every step)
        # out_ref:    (1, S, S) f32
        # canvas_ref: (2S, 2S) bf16 scratch

        # Zero only the uncovered border strips; all slice bounds are static ints.
        if y_min > 0:
            canvas_ref[0:y_min, :] = jnp.zeros((y_min, s2), jnp.bfloat16)
        if y_max < s2:
            canvas_ref[y_max:s2, :] = jnp.zeros((s2 - y_max, s2), jnp.bfloat16)
        if x_min > 0:
            canvas_ref[:, 0:x_min] = jnp.zeros((s2, x_min), jnp.bfloat16)
        if x_max < s2:
            canvas_ref[:, x_max:s2] = jnp.zeros((s2, s2 - x_max), jnp.bfloat16)

        # Paste the 4 quadrants (center snapping makes these offsets vreg-aligned).
        for i, (x1a, y1a, x2a, y2a, x1b, y1b, x2b, y2b) in enumerate(coords):
            canvas_ref[y1a:y2a, x1a:x2a] = (
                imgs_ref[i, 0, y1b:y2b, x1b:x2b].astype(jnp.bfloat16))

        # 2x2-mean resize 2S -> S entirely on the MXU (f32 accumulation):
        #   rows:  rowavg = P @ canvas        (S, 2S)
        #   cols:  out    = rowavg @ P^T      (S, S)   (NT dot_general, q@k^T style)
        rowavg = jnp.dot(p_ref[...], canvas_ref[...],
                         preferred_element_type=jnp.float32)
        out_ref[0] = jax.lax.dot_general(
            rowavg.astype(jnp.bfloat16), p_ref[...],
            dimension_numbers=(((1,), (1,)), ((), ())),
            preferred_element_type=jnp.float32)

    # Live VMEM per grid step (bytes): imgs block 16S^2 (x2 buffers) + P 4S^2 (x2)
    # + canvas 8S^2 + out 4S^2 (x2)  ~= 56*S^2.
    need = 56 * s * s
    vmem_limit = int(min(max(2 * need, 32 << 20), 112 << 20))
    # TODO(synk): on v7x (64 MiB physical VMEM) keep this <= ~56 MiB and either
    # strip-tile the canvas over output rows or DMA-paste straight from HBM for
    # S >~ 900; v5e/v6e (128 MiB) fit as-is.

    return pl.pallas_call(
        kernel,
        out_shape=jax.ShapeDtypeStruct((c, s, s), jnp.float32),
        grid=(c,),
        in_specs=[
            # per-channel block of the 4 source images; auto double-buffered so the
            # next channel's HBM->VMEM DMA hides behind this channel's MXU work
            pl.BlockSpec((4, 1, s, s), lambda ci: (0, ci, 0, 0)),
            # constant resize matrix: block index never changes -> DMA'd once
            pl.BlockSpec((s, s2), lambda ci: (0, 0)),
        ],
        out_specs=pl.BlockSpec((1, s, s), lambda ci: (ci, 0, 0)),
        scratch_shapes=[pltpu.VMEM((s2, s2), jnp.bfloat16)],
        compiler_params=pltpu.CompilerParams(
            # channels shard across the 2 v7x TensorCores (C=4 is balanced; for
            # C=3 one core has an idle tail -- split over row strips if it matters)
            dimension_semantics=("parallel",),
            vmem_limit_bytes=vmem_limit,
        ),
    )(images, p_mat)


def mosaic_boxes(boxes, coords, s):
    """boxes: (4, NB, 4) XYXY -> (shifted + 0.5-scaled boxes (4, NB, 4), valid (4, NB)).

    Plain jnp on purpose: touches ~4*NB*4 floats, so a dedicated pallas_call
    costs more in launch + DMA fixed overhead than the arithmetic itself.
    """
    outs, valids = [], []
    for i, (x1a, y1a, x2a, y2a, x1b, y1b, x2b, y2b) in enumerate(coords):
        b = boxes[i]                                      # (NB, 4)
        # Strict containment in the source crop -- matches Mosaic._mosaic4
        # (partially overlapping boxes are dropped, not clipped).
        valid = ((b[:, 0] >= float(x1b)) & (b[:, 1] >= float(y1b))
                 & (b[:, 2] < float(x2b)) & (b[:, 3] < float(y2b)))
        off = jnp.array([x1a - x1b, y1a - y1b, x1a - x1b, y1a - y1b], jnp.float32)
        outs.append((b + off) * 0.5)                      # T.Resize(S) on 2Sx2S -> 0.5x
        valids.append(valid)
    return jnp.stack(outs), jnp.stack(valids)


def mosaic_device(images, boxes, coords, s):
    """Device-side part: returns async jax arrays, no host synchronization."""
    image_final = mosaic_image(images, coords, s)
    out_boxes, valid = mosaic_boxes(boxes, coords, s)
    return image_final, out_boxes, valid


def filter_boxes_host(out_boxes, valid, labels):
    """Dynamic-shape boolean filtering (boxes[valid]) has no static-shape TPU
    equivalent; done host-side.  Keep this off the hot path (defer / batch it
    across samples) so the Pallas call stays fully asynchronous."""
    boxes_np = np.asarray(out_boxes)
    valid_np = np.asarray(valid).astype(bool)
    labels_np = np.asarray(labels)
    n = boxes_np.shape[0]
    boxes_final = np.concatenate(
        [boxes_np[i][valid_np[i]] for i in range(n)], axis=0).reshape(-1, 4)
    labels_final = np.concatenate(
        [labels_np[i][valid_np[i]] for i in range(n)], axis=0)
    return boxes_final, labels_final


def mosaic_forward(images, boxes, labels, p=1.0, seed=0, align_centers=True):
    """Mirrors Mosaic.forward for n=4 with the 3 'extra' samples already provided."""
    # TODO(synk): dataset indexing / pre_transform plumbing has no Pallas
    # equivalent; the 4 (image, boxes, labels) samples are passed in directly.
    rng = random.Random(seed)            # local RNG: don't reseed the global one
    if rng.uniform(0, 1) > p:
        return images[0], boxes[0], labels[0]

    n, c, h, w = images.shape
    image_size = int(sum(max(h, w) for _ in range(n)) / n)
    lo, hi = int(0.5 * image_size), int(1.5 * image_size)
    raw_cy, raw_cx = (rng.uniform(0.5 * image_size, 1.5 * image_size)
                      for _ in range(2))
    if align_centers:
        # y snaps to 16 (bf16 sublane packing), x to 128 (lane width); the snap
        # cascades to smaller powers of two when the [0.5S, 1.5S] range is small.
        center_y = _snap_center(raw_cy, lo, hi, 16)
        center_x = _snap_center(raw_cx, lo, hi, 128)
    else:
        center_y, center_x = int(raw_cy), int(raw_cx)
    coords = _mosaic4_coords(center_x, center_y, image_size)

    image_final, out_boxes, valid = mosaic_device(images, boxes, coords, image_size)
    boxes_final, labels_final = filter_boxes_host(out_boxes, valid, labels)
    return image_final, boxes_final, labels_final


if __name__ == "__main__":
    key = jax.random.PRNGKey(0)
    k_img, k_xy, k_wh, k_lab = jax.random.split(key, 4)

    N, C, S, NB = 4, 4, 16, 3
    images = jax.random.normal(k_img, (N, C, S, S), dtype=jnp.float32)
    xy1 = jax.random.uniform(k_xy, (N, NB, 2), minval=0.0, maxval=8.0)
    wh = jax.random.uniform(k_wh, (N, NB, 2), minval=1.0, maxval=7.5)
    boxes = jnp.concatenate([xy1, xy1 + wh], axis=-1).astype(jnp.float32)   # XYXY
    labels = jax.random.randint(k_lab, (N, NB), 0, 10, dtype=jnp.int32)

    # --- kernel vs. pure-numpy reference (unaligned center: exercises border
    #     zeroing and masked-offset pastes; kernel is correct for any coords) ---
    test_coords = _mosaic4_coords(19, 14, S)    # cx=19 (lane-unaligned), cy=14 (even)
    out = jax.block_until_ready(mosaic_image(images, test_coords, S))
    imgs_np = np.asarray(images)
    canvas = np.zeros((C, 2 * S, 2 * S), np.float32)
    for i, (x1a, y1a, x2a, y2a, x1b, y1b, x2b, y2b) in enumerate(test_coords):
        canvas[:, y1a:y2a, x1a:x2a] = imgs_np[i, :, y1b:y2b, x1b:x2b]
    ref = 0.25 * (canvas[:, 0::2, 0::2] + canvas[:, 0::2, 1::2]
                  + canvas[:, 1::2, 0::2] + canvas[:, 1::2, 1::2])
    np.testing.assert_allclose(np.asarray(out), ref, atol=0.06, rtol=0)   # bf16 rounding

    # --- full forward (aligned / snapped centers) ---
    image_final, boxes_final, labels_final = mosaic_forward(
        images, boxes, labels, p=1.0, seed=0)
    jax.block_until_ready(image_final)

    assert image_final.shape == (C, S, S)
    assert boxes_final.shape[-1] == 4
    assert boxes_final.shape[0] == labels_final.shape[0]
    print("KERNEL_OK")
</pallas_src>

<mosaic_0001>
module attributes {stable_mosaic.version = 11 : i64} {
  func.func @kernel(%arg0: i32, %arg1: memref<4x1x16x16xf32, #tpu.memory_space<vmem>>, %arg2: memref<16x32xbf16, #tpu.memory_space<vmem>>, %arg3: memref<1x16x16xf32, #tpu.memory_space<vmem>>, %arg4: memref<32x32xbf16, #tpu.memory_space<vmem>>) attributes {dimension_semantics = [#tpu.dimension_semantics<parallel>], iteration_bounds = array<i64: 4>, scalar_prefetch = 0 : i64, scratch_operands = 1 : i64, tpu.core_type = #tpu.core_type<tc>, window_params = [{transform_indices = @transform_0, window_bounds = array<i64: 4, 1, 16, 16>}, {pipeline_mode = #tpu.pipeline_mode<synchronous>, transform_indices = @transform_1, window_bounds = array<i64: 16, 32>}, {transform_indices = @transform_2, window_bounds = array<i64: 1, 16, 16>}]} {
    %cst = arith.constant 0.000000e+00 : bf16
    %0 = vector.broadcast %cst : bf16 to vector<2x32xbf16>
    %c30 = arith.constant 30 : index
    %c0 = arith.constant 0 : index
    %1 = vector.load %arg4[%c30, %c0] : memref<32x32xbf16, #tpu.memory_space<vmem>>, vector<2x32xbf16>
    tpu.vector_store %arg4[%c30, %c0], %0 {strides = array<i32>} : memref<32x32xbf16, #tpu.memory_space<vmem>>, vector<2x32xbf16>,
    %cst_0 = arith.constant 0.000000e+00 : bf16
    %2 = vector.broadcast %cst_0 : bf16 to vector<32x3xbf16>
    %c0_1 = arith.constant 0 : index
    %c0_2 = arith.constant 0 : index
    %3 = vector.load %arg4[%c0_1, %c0_2] : memref<32x32xbf16, #tpu.memory_space<vmem>>, vector<32x3xbf16>
    tpu.vector_store %arg4[%c0_1, %c0_2], %2 {strides = array<i32>} : memref<32x32xbf16, #tpu.memory_space<vmem>>, vector<32x3xbf16>,
    %c0_3 = arith.constant 0 : index
    %c0_4 = arith.constant 0 : index
    %c2 = arith.constant 2 : index
    %c0_5 = arith.constant 0 : index
    %4 = vector.load %arg1[%c0_3, %c0_4, %c2, %c0_5] : memref<4x1x16x16xf32, #tpu.memory_space<vmem>>, vector<1x1x14x16xf32>
    %5 = vector.shape_cast %4 : vector<1x1x14x16xf32> to vector<14x16xf32>
    %6 = arith.truncf %5 : vector<14x16xf32> to vector<14x16xbf16>
    %c0_6 = arith.constant 0 : index
    %c3 = arith.constant 3 : index
    %7 = vector.load %arg4[%c0_6, %c3] : memref<32x32xbf16, #tpu.memory_space<vmem>>, vector<14x16xbf16>
    tpu.vector_store %arg4[%c0_6, %c3], %6 {strides = array<i32>} : memref<32x32xbf16, #tpu.memory_space<vmem>>, vector<14x16xbf16>,
    %c1 = arith.constant 1 : index
    %c0_7 = arith.constant 0 : index
    %c2_8 = arith.constant 2 : index
    %c0_9 = arith.constant 0 : index
    %8 = vector.load %arg1[%c1, %c0_7, %c2_8, %c0_9] : memref<4x1x16x16xf32, #tpu.memory_space<vmem>>, vector<1x1x14x13xf32>
    %9 = vector.shape_cast %8 : vector<1x1x14x13xf32> to vector<14x13xf32>
    %10 = arith.truncf %9 : vector<14x13xf32> to vector<14x13xbf16>
    %c0_10 = arith.constant 0 : index
    %c19 = arith.constant 19 : index
    %11 = vector.load %arg4[%c0_10, %c19] : memref<32x32xbf16, #tpu.memory_space<vmem>>, vector<14x13xbf16>
    tpu.vector_store %arg4[%c0_10, %c19], %10 {strides = array<i32>} : memref<32x32xbf16, #tpu.memory_space<vmem>>, vector<14x13xbf16>,
    %c2_11 = arith.constant 2 : index
    %c0_12 = arith.constant 0 : index
    %c0_13 = arith.constant 0 : index
    %c0_14 = arith.constant 0 : index
    %12 = vector.load %arg1[%c2_11, %c0_12, %c0_13, %c0_14] : memref<4x1x16x16xf32, #tpu.memory_space<vmem>>, vector<1x1x16x16xf32>
    %13 = vector.shape_cast %12 : vector<1x1x16x16xf32> to vector<16x16xf32>
    %14 = arith.truncf %13 : vector<16x16xf32> to vector<16x16xbf16>
    %c14 = arith.constant 14 : index
    %c3_15 = arith.constant 3 : index
    %15 = vector.load %arg4[%c14, %c3_15] : memref<32x32xbf16, #tpu.memory_space<vmem>>, vector<16x16xbf16>
    tpu.vector_store %arg4[%c14, %c3_15], %14 {strides = array<i32>} : memref<32x32xbf16, #tpu.memory_space<vmem>>, vector<16x16xbf16>,
    %c3_16 = arith.constant 3 : index
    %c0_17 = arith.constant 0 : index
    %c0_18 = arith.constant 0 : index
    %c0_19 = arith.constant 0 : index
    %16 = vector.load %arg1[%c3_16, %c0_17, %c0_18, %c0_19] : memref<4x1x16x16xf32, #tpu.memory_space<vmem>>, vector<1x1x16x13xf32>
    %17 = vector.shape_cast %16 : vector<1x1x16x13xf32> to vector<16x13xf32>
    %18 = arith.truncf %17 : vector<16x13xf32> to vector<16x13xbf16>
    %c14_20 = arith.constant 14 : index
    %c19_21 = arith.constant 19 : index
    %19 = vector.load %arg4[%c14_20, %c19_21] : memref<32x32xbf16, #tpu.memory_space<vmem>>, vector<16x13xbf16>
    tpu.vector_store %arg4[%c14_20, %c19_21], %18 {strides = array<i32>} : memref<32x32xbf16, #tpu.memory_space<vmem>>, vector<16x13xbf16>,
    %c0_22 = arith.constant 0 : index
    %c0_23 = arith.constant 0 : index
    %20 = vector.load %arg2[%c0_22, %c0_23] : memref<16x32xbf16, #tpu.memory_space<vmem>>, vector<16x32xbf16>
    %c0_24 = arith.constant 0 : index
    %c0_25 = arith.constant 0 : index
    %21 = vector.load %arg4[%c0_24, %c0_25] : memref<32x32xbf16, #tpu.memory_space<vmem>>, vector<32x32xbf16>
    %cst_26 = arith.constant dense<0.000000e+00> : vector<16x32xf32>
    %22 = tpu.matmul %20, %21, %cst_26 {dimension_numbers = #tpu.dot_dimension_numbers<[1], [0], [0], [1], [0, 0, 1, 1], [], []>} : vector<16x32xbf16>, vector<32x32xbf16>, vector<16x32xf32> -> vector<16x32xf32>
    %23 = arith.truncf %22 : vector<16x32xf32> to vector<16x32xbf16>
    %c0_27 = arith.constant 0 : index
    %c0_28 = arith.constant 0 : index
    %24 = vector.load %arg2[%c0_27, %c0_28] : memref<16x32xbf16, #tpu.memory_space<vmem>>, vector<16x32xbf16>
    %cst_29 = arith.constant dense<0.000000e+00> : vector<16x16xf32>
    %25 = tpu.matmul %23, %24, %cst_29 {dimension_numbers = #tpu.dot_dimension_numbers<[1], [1], [0], [0], [0, 0, 1, 0], [], []>} : vector<16x32xbf16>, vector<16x32xbf16>, vector<16x16xf32> -> vector<16x16xf32>
    %c0_30 = arith.constant 0 : index
    %c0_31 = arith.constant 0 : index
    %c0_32 = arith.constant 0 : index
    %26 = vector.load %arg3[%c0_30, %c0_31, %c0_32] : memref<1x16x16xf32, #tpu.memory_space<vmem>>, vector<1x16x16xf32>
    %27 = vector.shape_cast %26 : vector<1x16x16xf32> to vector<16x16xf32>
    %28 = vector.shape_cast %25 : vector<16x16xf32> to vector<1x16x16xf32>
    tpu.vector_store %arg3[%c0_30, %c0_31, %c0_32], %28 {strides = array<i32>} : memref<1x16x16xf32, #tpu.memory_space<vmem>>, vector<1x16x16xf32>,
    return
  }
  func.func @transform_0(%arg0: i32) -> (i32, i32, i32, i32) {
    %c0_i32 = arith.constant 0 : i32
    %c0_i32_0 = arith.constant 0 : i32
    %c0_i32_1 = arith.constant 0 : i32
    %c0_i32_2 = arith.constant 0 : i32
    return %c0_i32, %arg0, %c0_i32_0, %c0_i32_1 : i32, i32, i32, i32
  }
  func.func @transform_1(%arg0: i32) -> (i32, i32) {
    %c0_i32 = arith.constant 0 : i32
    %c0_i32_0 = arith.constant 0 : i32
    %c0_i32_1 = arith.constant 0 : i32
    return %c0_i32, %c0_i32_0 : i32, i32
  }
  func.func @transform_2(%arg0: i32) -> (i32, i32, i32) {
    %c0_i32 = arith.constant 0 : i32
    %c0_i32_0 = arith.constant 0 : i32
    %c0_i32_1 = arith.constant 0 : i32
    return %arg0, %c0_i32, %c0_i32_0 : i32, i32, i32
  }
}

</mosaic_0001>

<llo_original>
// kernel: tpu_custom_call.1
$region0: #{tpu_custom_call.1}
  #allocation0 [shape = 'u32[]', space=smem, size = 0x4, offset = 0x4, fixed_abs, tag = 'smem constant byte address 0x4 - core index']
  #allocation1 [shape = 'u32[144,128]{1,0:T(1,128)}', space=vmem, size = 0x12000, scoped, tag = 'internal scratch']
  #allocation2 [shape = 'bf16[32,32]{1,0:T(16,128)(2,1)}', space=vmem, size = 0x2000, scoped, tag = 'scratch operand']
  #allocation9 [shape = 's32[]', space=sflag, size = 0x4, offset = 0, fixed_abs, tag = 'sflag constant byte address 0x0 - dummy sync flag']
  %s0 = inlined_call_operand.hbm [shape: f32[4,4,16,16], index: 0, kind: input, shape index: {}]
  %s1 = inlined_call_operand.hbm [shape: bf16[16,32], index: 1, kind: input, shape index: {}]
  %s2 = inlined_call_operand.hbm [shape: f32[4,16,16], index: 2, kind: output, shape index: {}]
  %s3 = sld [smem:[#allocation0]]
  $region49: #{tpu_custom_call.1} parent=0
    _
  %s5 = ssub.s32 1, %s3
  %s6 = scalar_select 0, %s5, %s3
  $region1: #{tpu_custom_call.1} parent=0
    #allocation3 [shape = 'u8[65536]{0}', space=vmem, size = 0x10000, scoped, tag = 'input window, operand 0']
    #allocation4 [shape = 's32[2]{0}', space=sflag, size = 0x8, scoped, tag = 'scoped memory for tpu_custom_call.1']
    #allocation5 [shape = 's32[2]{0}', space=sflag, size = 0x8, scoped, tag = 'scoped memory for tpu_custom_call.1']
    #allocation6 [shape = 'u8[4096]{0}', space=vmem, size = 0x1000, scoped, tag = 'input window, operand 1, single buffered']
    #allocation7 [shape = 's32[1]{0}', space=sflag, size = 0x4, scoped, tag = 'scoped memory for tpu_custom_call.1']
    #allocation8 [shape = 'u8[16384]{0}', space=vmem, size = 0x4000, scoped, tag = 'output window, operand 0']
    %7 = vsyncpa [#allocation4], 0
    %s8 = scalar_lea.sflag [#allocation4], 1
    %9 = vsyncpa %s8, 0
    %10 = vsyncpa [#allocation7], 0
    %11 = vsyncpa [#allocation5], 0
    %s12 = scalar_lea.sflag [#allocation5], 1
    %13 = vsyncpa %s12, 0
    loop: start=0, step=1, limit=6
    $region2: #{tpu_custom_call.1} parent=1 // loop_pre_header
      _
    $region3: #{tpu_custom_call.1} parent=1 // loop_header
      %s15 = sphi 0, %s19
      %p16 = scmp.ge.s32.totalorder %s15, 6
      %s25 = sphi 0, %s27
      %s28 = sphi 0, %s25
      %s29 = sphi 0, %s28
      %s45 = sphi 0, %s29
      %s49 = sphi 0, %s49
      %s51 = sphi 0, %s49
      %s52 = sphi 0, %s51
      %s66 = sphi 0, %s52
      %s72 = sphi 0, %s74
      %s75 = sphi 0, %s72
      %s76 = sphi 0, %s75
      %s92 = sphi 0, %s76
    $region4: #{tpu_custom_call.1} parent=1 // loop_header_branch
      %18 = sbr.rel (%p16) target = $region8
    $region5: #{tpu_custom_call.1} parent=1 // loop_body
      %s20 = ssub.s32 %s15, 1
      %s21 = ssub.s32 %s15, 2
      %s22 = sadd.s32 %s15, 1
      %s23 = ssub.s32 %s15, %s22
      %p24 = scmp.eq.s32.totalorder %s23, 0
      %s26 = sadd.s32 %s25, 1
      %s27 = scalar_select %p24, %s25, %s26
      %p30 = pneg %p24
      %p31 = scmp.eq.s32.totalorder %s15, 3
      %p32 = por %p30, %p31
      %p33 = scmp.ne.s32.totalorder %s25, %s28
      %p34 = scmp.eq.s32.totalorder %s15, 0
      %p35 = por %p33, %p34
      %p36 = scmp.ne.s32.totalorder %s25, %s28
      %p37 = scmp.eq.s32.totalorder %s20, 3
      %p38 = por %p36, %p37
      %p39 = scmp.ne.s32.totalorder %s28, %s29
      %p40 = scmp.eq.s32.totalorder %s20, 0
      %p41 = por %p39, %p40
      %p42 = scmp.ne.s32.totalorder %s28, %s29
      %p43 = scmp.eq.s32.totalorder %s21, 3
      %p44 = por %p42, %p43
      %p46 = scmp.ne.s32.totalorder %s29, %s45
      %p47 = scmp.eq.s32.totalorder %s21, 0
      %p48 = por %p46, %p47
      %s50 = sadd.s32 %s49, 1
      %p53 = scmp.eq.s32.totalorder %s15, 3
      %p54 = scmp.ne.s32.totalorder %s49, %s51
      %p55 = scmp.eq.s32.totalorder %s15, 0
      %p56 = por %p54, %p55
      %p57 = scmp.ne.s32.totalorder %s49, %s51
      %p58 = scmp.eq.s32.totalorder %s20, 3
      %p59 = por %p57, %p58
      %p60 = scmp.ne.s32.totalorder %s51, %s52
      %p61 = scmp.eq.s32.totalorder %s20, 0
      %p62 = por %p60, %p61
      %p63 = scmp.ne.s32.totalorder %s51, %s52
      %p64 = scmp.eq.s32.totalorder %s21, 3
      %p65 = por %p63, %p64
      %p67 = scmp.ne.s32.totalorder %s52, %s66
      %p68 = scmp.eq.s32.totalorder %s21, 0
      %p69 = por %p67, %p68
      %s70 = ssub.s32 %s15, %s22
      %p71 = scmp.eq.s32.totalorder %s70, 0
      %s73 = sadd.s32 %s72, 1
      %s74 = scalar_select %p71, %s72, %s73
      %p77 = pneg %p71
      %p78 = scmp.eq.s32.totalorder %s15, 3
      %p79 = por %p77, %p78
      %p80 = scmp.ne.s32.totalorder %s72, %s75
      %p81 = scmp.eq.s32.totalorder %s15, 0
      %p82 = por %p80, %p81
      %p83 = scmp.ne.s32.totalorder %s72, %s75
      %p84 = scmp.eq.s32.totalorder %s20, 3
      %p85 = por %p83, %p84
      %p86 = scmp.ne.s32.totalorder %s75, %s76
      %p87 = scmp.eq.s32.totalorder %s20, 0
      %p88 = por %p86, %p87
      %p89 = scmp.ne.s32.totalorder %s75, %s76
      %p90 = scmp.eq.s32.totalorder %s21, 3
      %p91 = por %p89, %p90
      %p93 = scmp.ne.s32.totalorder %s76, %s92
      %p94 = scmp.eq.s32.totalorder %s21, 0
      %p95 = por %p93, %p94
      %p96 = scmp.le.s32.totalorder 1, %s15
      %p97 = scmp.lt.s32.totalorder %s15, 5
      %p98 = pnand %p96, %p97
      %p99 = pneg %p98
      // Predicated region
      $region9: #{tpu_custom_call.1} parent=5 // pred_check
        _
      $region10: #{tpu_custom_call.1} parent=5 // pred_check_branch
        %101 = sbr.rel (%p98) target = $region12
      $region11: #{tpu_custom_call.1} parent=5 // pred_region
        %s102 = ssub.s32 %s15, 1
        // Predicated region
        $region13: #{tpu_custom_call.1} parent=11 // pred_check
          %p103 = pneg %p62
        $region14: #{tpu_custom_call.1} parent=11 // pred_check_branch
          %105 = sbr.rel (%p103) target = $region16
        $region15: #{tpu_custom_call.1} parent=11 // pred_region
          %s107 = ssub.s32 128, 128
          %108 = vsyncadd [#allocation7], %s107
          %s109 = sshll.u32 [#allocation6], 4
          %s110 = int_to_ptr.vmem [resolvable:$true] %s109
          %115 = dma.hbm_to_vmem [thread:$0]  %s1, 128, %s110, [#allocation7], 64, 64, 4
        $region16: #{tpu_custom_call.1} parent=11 // pred_fallthru
          _
      $region12: #{tpu_custom_call.1} parent=5 // pred_fallthru
        _
      %p116 = scmp.lt.s32.totalorder %s15, 4
      // Predicated region
      $region17: #{tpu_custom_call.1} parent=5 // pred_check
        %p117 = pneg %p116
      $region18: #{tpu_custom_call.1} parent=5 // pred_check_branch
        %119 = sbr.rel (%p117) target = $region20
      $region19: #{tpu_custom_call.1} parent=5 // pred_region
        // Predicated region
        $region21: #{tpu_custom_call.1} parent=19 // pred_check
          %p120 = pneg %p35
        $region22: #{tpu_custom_call.1} parent=19 // pred_check_branch
          %122 = sbr.rel (%p120) target = $region24
        $region23: #{tpu_custom_call.1} parent=19 // pred_region
          #allocation10 [shape = 'u32[6]{0}', space=smem, size = 0x18, scoped, tag = 'DMA stride descriptor']
          %s123 = sand.u32 %s25, 1
          %s124 = scalar_lea.sflag [#allocation4], %s123
          %s125 = sand.u32 %s25, 1
          %s126 = smul.addr %s125, 64
          %s127 = scalar_lea.vmem [#allocation3], %s126
          %s129 = ssub.s32 1024, 1024
          %130 = vsyncadd %s124, %s129
          %s131 = smul.addr %s15, 2
          %s132 = smul.addr %s131, 128
          %s133 = scalar_lea.hbm %s0, %s132
          %s135 = sshll.u32 1, 14
          %s136 = sxor.u32 4294967295, %s135
          %s138 = sld [smem:[#allocation0]]
          %s139 = sadd.s32 2, %s138
          %s141 = sshll.u32 7, 26
          %s142 = sxor.u32 4294967295, %s141
          %s143 = sand.u32 0, %s142
          %s144 = sshll.u32 %s139, 26
          %s145 = sor.u32 %s143, %s144
          %s146 = sshll.u32 %s127, 4
          %s147 = int_to_ptr.vmem [resolvable:$true] %s146
          %153 = sst [smem:[#allocation10]] 1024
          %s154 = scalar_lea.smem [#allocation10], 1
          %155 = sst [smem:[%s154]] 256
          %s156 = scalar_lea.smem [#allocation10], 2
          %157 = sst [smem:[%s156]] 2
          %s158 = scalar_lea.smem [#allocation10], 3
          %159 = sst [smem:[%s158]] 128
          %s160 = scalar_lea.smem [#allocation10], 4
          %161 = sst [smem:[%s160]] 128
          %s162 = scalar_lea.smem [#allocation10], 5
          %163 = sst [smem:[%s162]] 8
          %165 = dma.general %s133, 1024, %s147, %s124, [#allocation9], [#allocation10], %s145, 0
        $region24: #{tpu_custom_call.1} parent=19 // pred_fallthru
          _
      $region20: #{tpu_custom_call.1} parent=5 // pred_fallthru
        _
      %p166 = scmp.le.s32.totalorder 1, %s15
      %p167 = scmp.lt.s32.totalorder %s15, 5
      %p168 = pnand %p166, %p167
      %p169 = pneg %p168
      // Predicated region
      $region25: #{tpu_custom_call.1} parent=5 // pred_check
        _
      $region26: #{tpu_custom_call.1} parent=5 // pred_check_branch
        %171 = sbr.rel (%p168) target = $region28
      $region27: #{tpu_custom_call.1} parent=5 // pred_region
        %s172 = ssub.s32 %s15, 1
        %s173 = sand.u32 %s28, 1
        %s174 = scalar_lea.sflag [#allocation4], %s173
        %s175 = sand.u32 %s28, 1
        %s176 = smul.addr %s175, 64
        %s177 = scalar_lea.vmem [#allocation3], %s176
        // Predicated region
        $region29: #{tpu_custom_call.1} parent=27 // pred_check
          %p178 = pneg %p41
        $region30: #{tpu_custom_call.1} parent=27 // pred_check_branch
          %180 = sbr.rel (%p178) target = $region32
        $region31: #{tpu_custom_call.1} parent=27 // pred_region
          %181 = dma.done %s174, 1024
        $region32: #{tpu_custom_call.1} parent=27 // pred_fallthru
          _
        // Predicated region
        $region33: #{tpu_custom_call.1} parent=27 // pred_check
          %p182 = pneg %p62
        $region34: #{tpu_custom_call.1} parent=27 // pred_check_branch
          %184 = sbr.rel (%p182) target = $region36
        $region35: #{tpu_custom_call.1} parent=27 // pred_region
          %185 = dma.done [#allocation7], 128
        $region36: #{tpu_custom_call.1} parent=27 // pred_fallthru
          _
        %s186 = sand.u32 %s28, 1
        %s187 = scalar_lea.sflag [#allocation4], %s186
        %s188 = sand.u32 %s28, 1
        %s189 = smul.addr %s188, 64
        %s190 = scalar_lea.vmem [#allocation3], %s189
        %p191 = pneg %p41
        %p192 = pneg %p38
        %p193 = pneg %p62
        %p194 = pneg %p59
        %p195 = pneg %p88
        %p196 = pneg %p85
        %s197 = sand.u32 %s75, 1
        %s198 = scalar_lea.sflag [#allocation5], %s197
        %s199 = sand.u32 %s75, 1
        %s200 = smul.addr %s199, 16
        %s201 = scalar_lea.vmem [#allocation8], %s200
        %vm203 = vcmask 261127
        %204 = vst.msk [vmem:[#allocation2 + $0x8] sm:$0x80] %vm203, 0
        %vm205 = vcmask 23552
        %206 = vst.msk [vmem:[#allocation2] sm:$0xff] %vm205, 0
        %207 = vst.msk [vmem:[#allocation2 + $0x8] sm:$0xff] %vm205, 0
        %v208 = vld [vmem:[%s177 + $0x2] sm:$0xff]
        %v209 = vld [vmem:[%s177 + $0xa] sm:$0x3f]
        %v210 = vpack.c.bf16 %v209, %v208
        %212 = vrot.lane.b32.xlu0 %v210, 3
        %v213 = vpop.permute.xlu0 %212
        %vm215 = vcmask 153624
        %216 = vst.msk [vmem:[#allocation2] sm:$0x7f] %vm215, %v213
        %s217 = scalar_lea.vmem %s177, 16 [#allocation3]
        %v218 = vld [vmem:[%s217 + $0x2] sm:$0xff]
        %v219 = vld [vmem:[%s217 + $0xa] sm:$0x3f]
        %v220 = vpack.c.bf16 %v219, %v218
        %222 = vrot.lane.b32.xlu0 %v220, 19
        %v223 = vpop.permute.xlu0 %222
        %vm225 = vcmask 260248
        %226 = vst.msk [vmem:[#allocation2] sm:$0x7f] %vm225, %v223
        %s227 = scalar_lea.vmem %s177, 32 [#allocation3]
        %v228 = vld [vmem:[%s227] sm:$0xff]
        %v229 = vld [vmem:[%s227 + $0x8] sm:$0xff]
        %v230 = vpack.c.bf16 %v229, %v228
        %v232 = vrot.slane %v230, 1
        %233 = vrot.lane.b32.xlu0 %v232, 3
        %v234 = vpop.permute.xlu0 %233
        %vm236 = vcmask 154655
        %237 = vst.msk [vmem:[#allocation2] sm:$0x80] %vm236, %v234
        %238 = vst.msk [vmem:[#allocation2 + $0x8] sm:$0x7f] %vm215, %v234
        %s239 = scalar_lea.vmem %s177, 48 [#allocation3]
        %v240 = vld [vmem:[%s239] sm:$0xff]
        %v241 = vld [vmem:[%s239 + $0x8] sm:$0xff]
        %v242 = vpack.c.bf16 %v241, %v240
        %v244 = vrot.slane %v242, 1
        %245 = vrot.lane.b32.xlu0 %v244, 19
        %v246 = vpop.permute.xlu0 %245
        %vm248 = vcmask 261279
        %249 = vst.msk [vmem:[#allocation2] sm:$0x80] %vm248, %v246
        %250 = vst.msk [vmem:[#allocation2 + $0x8] sm:$0x7f] %vm225, %v246
        %v251 = vld [vmem:[#allocation6] sm:$0xf]
        %v252 = vld [vmem:[#allocation6 + $0x4] sm:$0xf]
        %v253 = vld [vmem:[#allocation2] sm:$0xff]
        %v254 = vld [vmem:[#allocation2 + $0x8] sm:$0xff]
        %v257 = vunpack.c.l.b16 %v251
        %v258 = vunpack.c.l.b16 %v252
        %v259 = vpack.c.b16 %v258, %v257
        %vm260 = vcmask 261120
        %v262 = vsel %vm260, %v259, 0
        %264 = vmatprep.subr.bf16.mxu0 0
        %265 = vmatpush1.bf16.msra.mxu0 %v253
        %266 = vmatprep.subr.bf16.mxu0 0
        %267 = vmatpush1.bf16.msra.mxu0 %v254
        %268 = vmatprep.subr.bf16.mxu0 0
        %269 = vmatpush1.bf16.msra.mxu0 0
        %270 = vmatprep.subr.bf16.mxu0 0
        %271 = vmatpush1.bf16.msra.mxu0 0
        %272 = vmatprep.subr.bf16.mxu0 0
        %273 = vmatpush1.bf16.msra.mxu0 0
        %274 = vmatprep.subr.bf16.mxu0 0
        %275 = vmatpush1.bf16.msra.mxu0 0
        %276 = vmatprep.subr.bf16.mxu0 0
        %277 = vmatpush1.bf16.msra.mxu0 0
        %278 = vmatprep.subr.bf16.mxu0 0
        %279 = vmatpush1.bf16.msra.mxu0 0
        %280 = vmatprep.subr.bf16.mxu0 0
        %281 = vmatpush1.bf16.msra.mxu0 0
        %282 = vmatprep.subr.bf16.mxu0 0
        %283 = vmatpush1.bf16.msra.mxu0 0
        %284 = vmatprep.subr.bf16.mxu0 0
        %285 = vmatpush1.bf16.msra.mxu0 0
        %286 = vmatprep.subr.bf16.mxu0 0
        %287 = vmatpush1.bf16.msra.mxu0 0
        %288 = vmatprep.subr.bf16.mxu0 0
        %289 = vmatpush1.bf16.msra.mxu0 0
        %290 = vmatprep.subr.bf16.mxu0 0
        %291 = vmatpush1.bf16.msra.mxu0 0
        %292 = vmatprep.subr.bf16.mxu0 0
        %293 = vmatpush1.bf16.msra.mxu0 0
        %294 = vmatprep.subr.bf16.mxu0 0
        %295 = vmatpush1.bf16.msra.mxu0 0
        %296 = vmatprep.mubr.bf16.mxu0 0
        %297 = vmatmul.mubr.bf16.gmra.mrb[0].mxu0 %v262
        %v298 = vpop.f32.mrb[0].mxu0
        %v299 = vadd.f32 0.0, %v298
        %v300 = vpop.f32.mrb[0].mxu0
        %v301 = vpop.f32.mrb[0].mxu0
        %v302 = vadd.f32 0.0, %v301
        %v303 = vpop.f32.mrb[0].mxu0
        %304 = vdwg.mxu0
        %v305 = vpack.c.bf16 %v302, %v299
        %v307 = vsel %vm260, %v305, 0
        %309 = vmatprep.subr.bf16.mxu0 0
        %310 = vmatpush1.bf16.xpose.msra.mxu0 %v262
        %311 = vmatprep.subr.bf16.mxu0 0
        %312 = vmatpush1.bf16.xpose.msra.mxu0 0
        %313 = vmatprep.subr.bf16.mxu0 0
        %314 = vmatpush1.bf16.xpose.msra.mxu0 0
        %315 = vmatprep.subr.bf16.mxu0 0
        %316 = vmatpush1.bf16.xpose.msra.mxu0 0
        %317 = vmatprep.subr.bf16.mxu0 0
        %318 = vmatpush1.bf16.xpose.msra.mxu0 0
        %319 = vmatprep.subr.bf16.mxu0 0
        %320 = vmatpush1.bf16.xpose.msra.mxu0 0
        %321 = vmatprep.subr.bf16.mxu0 0
        %322 = vmatpush1.bf16.xpose.msra.mxu0 0
        %323 = vmatprep.subr.bf16.mxu0 0
        %324 = vmatpush1.bf16.xpose.msra.mxu0 0
        %325 = vmatprep.subr.bf16.mxu0 0
        %326 = vmatpush1.bf16.xpose.msra.mxu0 0
        %327 = vmatprep.subr.bf16.mxu0 0
        %328 = vmatpush1.bf16.xpose.msra.mxu0 0
        %329 = vmatprep.subr.bf16.mxu0 0
        %330 = vmatpush1.bf16.xpose.msra.mxu0 0
        %331 = vmatprep.subr.bf16.mxu0 0
        %332 = vmatpush1.bf16.xpose.msra.mxu0 0
        %333 = vmatprep.subr.bf16.mxu0 0
        %334 = vmatpush1.bf16.xpose.msra.mxu0 0
        %335 = vmatprep.subr.bf16.mxu0 0
        %336 = vmatpush1.bf16.xpose.msra.mxu0 0
        %337 = vmatprep.subr.bf16.mxu0 0
        %338 = vmatpush1.bf16.xpose.msra.mxu0 0
        %339 = vmatprep.subr.bf16.mxu0 0
        %340 = vmatpush1.bf16.xpose.msra.mxu0 0
        %341 = vmatprep.mubr.bf16.mxu0 0
        %342 = vmatmul.mubr.bf16.gmra.mrb[0].mxu0 %v307
        %v343 = vpop.f32.mrb[0].mxu0
        %v344 = vadd.f32 0.0, %v343
        %v345 = vpop.f32.mrb[0].mxu0
        %v346 = vpop.f32.mrb[0].mxu0
        %v347 = vadd.f32 0.0, %v346
        %v348 = vpop.f32.mrb[0].mxu0
        %349 = vdwg.mxu0
        %vm350 = vcmask 130048
        %351 = vst.msk [vmem:[%s201] sm:$0xff] %vm350, %v344
        %352 = vst.msk [vmem:[%s201 + $0x8] sm:$0xff] %vm350, %v347
        %s353 = sand.u32 %s75, 1
        %s354 = scalar_lea.sflag [#allocation5], %s353
        %s355 = sand.u32 %s75, 1
        %s356 = smul.addr %s355, 16
        %s357 = scalar_lea.vmem [#allocation8], %s356
        // Predicated region
        $region37: #{tpu_custom_call.1} parent=27 // pred_check
          %p358 = pneg %p85
        $region38: #{tpu_custom_call.1} parent=27 // pred_check_branch
          %360 = sbr.rel (%p358) target = $region40
        $region39: #{tpu_custom_call.1} parent=27 // pred_region
          %s362 = ssub.s32 256, 256
          %363 = vsyncadd %s354, %s362
          %s364 = smul.addr %s20, 2
          %s365 = smul.addr %s364, 128
          %s366 = scalar_lea.hbm %s2, %s365
          %s367 = sshll.u32 %s357, 4
          %s368 = int_to_ptr.vmem [resolvable:$true] %s367
          %373 = dma.vmem_to_hbm [thread:$0]  %s368, 256, %s366, %s354, 128, 128, 8
        $region40: #{tpu_custom_call.1} parent=27 // pred_fallthru
          _
      $region28: #{tpu_custom_call.1} parent=5 // pred_fallthru
        _
      %p374 = scmp.le.s32.totalorder 2, %s15
      // Predicated region
      $region41: #{tpu_custom_call.1} parent=5 // pred_check
        %p375 = pneg %p374
      $region42: #{tpu_custom_call.1} parent=5 // pred_check_branch
        %377 = sbr.rel (%p375) target = $region44
      $region43: #{tpu_custom_call.1} parent=5 // pred_region
        %s378 = ssub.s32 %s15, 2
        // Predicated region
        $region45: #{tpu_custom_call.1} parent=43 // pred_check
          %p379 = pneg %p91
        $region46: #{tpu_custom_call.1} parent=43 // pred_check_branch
          %381 = sbr.rel (%p379) target = $region48
        $region47: #{tpu_custom_call.1} parent=43 // pred_region
          %s382 = sand.u32 %s76, 1
          %s383 = scalar_lea.sflag [#allocation5], %s382
          %s384 = sand.u32 %s76, 1
          %s385 = smul.addr %s384, 16
          %s386 = scalar_lea.vmem [#allocation8], %s385
          %387 = dma.done %s383, 256
        $region48: #{tpu_custom_call.1} parent=43 // pred_fallthru
          _
      $region44: #{tpu_custom_call.1} parent=5 // pred_fallthru
        _
    $region6: #{tpu_custom_call.1} parent=1 // loop_footer
      %s19 = sadd.s32 1, %s15
    $region7: #{tpu_custom_call.1} parent=1 // loop_footer_branch
      %14 = sbr.rel target = $region3
    $region8: #{tpu_custom_call.1} parent=1 // loop_exit
      _
    %388 = vsyncpa [#allocation4], 1
    %s389 = scalar_lea.sflag [#allocation4], 1
    %390 = vsyncpa %s389, 1
    %391 = vsyncpa [#allocation7], 1
    %392 = vsyncpa [#allocation5], 1
    %s393 = scalar_lea.sflag [#allocation5], 1
    %394 = vsyncpa %s393, 1

</llo_original>
